<compile_context>
chip_gen: v6e
topology: v6e:2x2x1
jax: 0.10.0
libtpu: 0.0.40
codegen_flags: <defaults>
</compile_context>

<pallas_src>
import functools

import jax
import jax.numpy as jnp
import numpy as np
from jax import lax
from jax.experimental import pallas as pl
from jax.experimental.pallas import tpu as pltpu


def _round_up(x, m):
    return ((x + m - 1) // m) * m


# ----------------------------------------------------------------------------
# Shared per-step math (pure function of loaded VMEM values / vreg arrays).
# ----------------------------------------------------------------------------
def _decoder_step(x, h, eo, w_x, w_h, w_ch, w_ih, w_o, bias, *, H, O, L, SEC):
    f32 = jnp.float32
    # bias slab layout (each section padded to SEC=128 lanes -> tile-aligned slices),
    # pre-broadcast to B sublanes at pack time:
    #   [0      : L+H    )  b_attn | b_comb
    #   [SEC    : SEC+L+3H) zeros(L) | b_hh     (aligned with h @ W_h output)
    #   [2*SEC  : 2*SEC+3H) b_ih
    #   [3*SEC  : 3*SEC+O ) b_out
    b_x = bias[:, 0:L + H]
    b_h = bias[:, SEC:SEC + L + 3 * H]
    b_ih = bias[:, 2 * SEC:2 * SEC + 3 * H]
    b_o = bias[:, 3 * SEC:3 * SEC + O]

    # Two fused matmuls cover attn logits (x & h parts), the x-part of attn_combine,
    # and all three GRU hidden-side gates.
    xw = jnp.dot(x, w_x, preferred_element_type=f32) + b_x        # (B, L+H)
    hw = jnp.dot(h, w_h, preferred_element_type=f32) + b_h        # (B, L+3H)

    # attn_weights = softmax(attn(cat(embedded, hidden)))
    logits = xw[:, :L] + hw[:, :L]                                # (B, L)
    m = jnp.max(logits, axis=-1, keepdims=True)
    e = jnp.exp(logits - m)
    # approx reciprocal -> EUP slot, off the VALU critical path.
    attn_w = e * pl.reciprocal(jnp.sum(e, axis=-1, keepdims=True), approx=True)

    # attn_applied = bmm(attn_weights, encoder_outputs)
    applied = jnp.dot(attn_w, eo, preferred_element_type=f32)     # (B, H)

    # relu(attn_combine(cat(embedded, attn_applied)))
    g = jnp.maximum(
        xw[:, L:] + jnp.dot(applied, w_ch, preferred_element_type=f32), 0.0)

    # Single-step GRU cell (PyTorch gate order: r, z, n). b_hh already added via hw.
    gi = jnp.dot(g, w_ih, preferred_element_type=f32) + b_ih      # (B, 3H)
    gh = hw[:, L:]                                                # (B, 3H)
    rz = jax.nn.sigmoid(gi[:, :2 * H] + gh[:, :2 * H])            # one EUP push for r,z
    r = rz[:, :H]
    z = rz[:, H:]
    n = jnp.tanh(gi[:, 2 * H:] + r * gh[:, 2 * H:])
    h_new = (1.0 - z) * n + z * h

    out = jnp.dot(h_new, w_o, preferred_element_type=f32) + b_o   # (B, O)
    return out, h_new, attn_w


# ----------------------------------------------------------------------------
# Kernels
# ----------------------------------------------------------------------------
def attn_decoder_kernel(x_ref, h_ref, eo_ref, wx_ref, wh_ref, wch_ref, wih_ref,
                        wo_ref, b_ref, out_ref, hnew_ref, attnw_ref, *, H, O, L, SEC):
    out, h_new, attn_w = _decoder_step(
        x_ref[...], h_ref[...], eo_ref[...],
        wx_ref[...], wh_ref[...], wch_ref[...], wih_ref[...], wo_ref[...],
        b_ref[...], H=H, O=O, L=L, SEC=SEC)
    out_ref[...] = out
    hnew_ref[...] = h_new
    attnw_ref[...] = attn_w


def attn_decoder_seq_kernel(x_ref, h0_ref, eo_ref, wx_ref, wh_ref, wch_ref, wih_ref,
                            wo_ref, b_ref, out_ref, hlast_ref, attnw_ref,
                            *, H, O, L, SEC, T):
    # Single kernel invocation (no grid): everything (weights, bias, encoder_outputs,
    # all T inputs, all T outputs) is VMEM-resident for the entire decode; the hidden
    # state is carried in vregs by the fori_loop, so the only per-step stores are the
    # two small output rows.
    eo = eo_ref[...]
    w_x = wx_ref[...]
    w_h = wh_ref[...]
    w_ch = wch_ref[...]
    w_ih = wih_ref[...]
    w_o = wo_ref[...]
    bias = b_ref[...]

    def body(t, h):
        out, h_new, attn_w = _decoder_step(
            x_ref[t], h, eo, w_x, w_h, w_ch, w_ih, w_o, bias,
            H=H, O=O, L=L, SEC=SEC)
        out_ref[t] = out
        attnw_ref[t] = attn_w
        return h_new

    # T is small and static -> fully unroll so the scheduler can overlap adjacent
    # steps' independent work (step t+1's x-path dot vs step t's GRU tail).
    h_last = lax.fori_loop(0, T, body, h0_ref[...], unroll=True)
    hlast_ref[...] = h_last


# ----------------------------------------------------------------------------
# Parameter init (PyTorch-style uniform) and one-time packing (hoisted prep).
# ----------------------------------------------------------------------------
def init_params(key, hidden_size, output_size, max_length):
    H, O, L = hidden_size, output_size, max_length
    ks = jax.random.split(key, 10)

    def uni(k, shape, fan_in):
        b = 1.0 / np.sqrt(fan_in)
        return jax.random.uniform(k, shape, jnp.float32, -b, b)

    return dict(
        W_attn=uni(ks[0], (L, H + O), H + O), b_attn=uni(ks[1], (L,), H + O),
        W_comb=uni(ks[2], (H, H + O), H + O), b_comb=uni(ks[3], (H,), H + O),
        W_ih=uni(ks[4], (3 * H, H), H), W_hh=uni(ks[5], (3 * H, H), H),
        b_ih=uni(ks[6], (3 * H,), H), b_hh=uni(ks[7], (3 * H,), H),
        W_out=uni(ks[8], (O, H), H), b_out=uni(ks[9], (O,), H))


def pack_params(params, hidden_size, output_size, max_length, batch_size):
    """One-time weight prep: transposes, concat-splits, fused packs, bias slab."""
    H, O, L = hidden_size, output_size, max_length
    p = params
    # Concat order in the module is [x | h] and [x | attn_applied] (x = O columns first).
    Wa_x = p["W_attn"][:, :O].T            # (O, L)
    Wa_h = p["W_attn"][:, O:].T            # (H, L)
    Wc_x = p["W_comb"][:, :O].T            # (O, H)
    Wc_h = p["W_comb"][:, O:].T            # (H, H)
    Wih_T = p["W_ih"].T                    # (H, 3H)  gate order r, z, n
    Whh_T = p["W_hh"].T                    # (H, 3H)

    W_x = jnp.concatenate([Wa_x, Wc_x], axis=1)      # (O, L+H)
    W_h = jnp.concatenate([Wa_h, Whh_T], axis=1)     # (H, L+3H)
    W_o = p["W_out"].T                               # (H, O)

    sec = _round_up(max(L + H, L + 3 * H, 3 * H, O), 128)

    def pad_to(v, n):
        return jnp.pad(v, (0, n - v.shape[0]))

    bias_row = jnp.concatenate([
        pad_to(jnp.concatenate([p["b_attn"], p["b_comb"]]), sec),
        pad_to(jnp.concatenate([jnp.zeros((L,), jnp.float32), p["b_hh"]]), sec),
        pad_to(p["b_ih"], sec),
        pad_to(p["b_out"], sec),
    ]).reshape(1, 4 * sec)
    # Pre-broadcast to B sublanes once at pack time: the in-kernel bias adds become
    # plain vreg adds instead of per-step (1,N)->(B,N) sublane broadcasts.
    bias = jnp.broadcast_to(bias_row, (batch_size, 4 * sec))

    return dict(W_x=W_x, W_h=W_h, W_ch=Wc_h, W_ih=Wih_T, W_o=W_o,
                bias=bias, sec=sec)


# ----------------------------------------------------------------------------
# Wrappers
# ----------------------------------------------------------------------------
def attn_decoder_forward(packed, f_input, hidden, encoder_output, encoder_outputs,
                         hidden_size, output_size, max_length):
    """Single decoder step: f_input (B,O), hidden (1,B,H), encoder_outputs (L,H)."""
    del encoder_output  # unused in the reference forward
    H, O, L = hidden_size, output_size, max_length
    B = f_input.shape[0]
    sec = packed["sec"]
    vm = pl.BlockSpec(memory_space=pltpu.MemorySpace.VMEM)
    kern = functools.partial(attn_decoder_kernel, H=H, O=O, L=L, SEC=sec)
    out, h_new, attn_w = pl.pallas_call(
        kern,
        out_shape=(
            jax.ShapeDtypeStruct((B, O), jnp.float32),
            jax.ShapeDtypeStruct((B, H), jnp.float32),
            jax.ShapeDtypeStruct((B, L), jnp.float32),
        ),
        in_specs=[vm] * 9,
        out_specs=(vm, vm, vm),
    )(f_input, hidden[0], encoder_outputs,
      packed["W_x"], packed["W_h"], packed["W_ch"], packed["W_ih"], packed["W_o"],
      packed["bias"])
    return out, h_new[None], attn_w


def attn_decoder_decode(packed, f_inputs, hidden, encoder_outputs,
                        hidden_size, output_size, max_length):
    """T decoder steps fused in ONE pallas_call (no grid, unrolled in-kernel loop).

    f_inputs (T,B,O); hidden carried in vregs; weights DMA'd into VMEM exactly once.
    """
    H, O, L = hidden_size, output_size, max_length
    T, B, _ = f_inputs.shape
    sec = packed["sec"]
    vm = pl.BlockSpec(memory_space=pltpu.MemorySpace.VMEM)
    kern = functools.partial(attn_decoder_seq_kernel, H=H, O=O, L=L, SEC=sec, T=T)
    outs, h_last, attn_ws = pl.pallas_call(
        kern,
        out_shape=(
            jax.ShapeDtypeStruct((T, B, O), jnp.float32),
            jax.ShapeDtypeStruct((B, H), jnp.float32),
            jax.ShapeDtypeStruct((T, B, L), jnp.float32),
        ),
        in_specs=[vm] * 9,
        out_specs=(vm, vm, vm),
    )(f_inputs, hidden[0], encoder_outputs,
      packed["W_x"], packed["W_h"], packed["W_ch"], packed["W_ih"], packed["W_o"],
      packed["bias"])
    return outs, h_last[None], attn_ws


# ----------------------------------------------------------------------------
# Pure-JAX reference (verbatim replica of the PyTorch forward) for verification.
# ----------------------------------------------------------------------------
def reference_step(params, x, h, encoder_outputs, H, O, L):
    p = params
    cat1 = jnp.concatenate([x, h], axis=1)
    aw = jax.nn.softmax(cat1 @ p["W_attn"].T + p["b_attn"], axis=-1)
    applied = aw @ encoder_outputs
    cat2 = jnp.concatenate([x, applied], axis=1)
    g = jax.nn.relu(cat2 @ p["W_comb"].T + p["b_comb"])
    gi = g @ p["W_ih"].T + p["b_ih"]
    gh = h @ p["W_hh"].T + p["b_hh"]
    r = jax.nn.sigmoid(gi[:, :H] + gh[:, :H])
    z = jax.nn.sigmoid(gi[:, H:2 * H] + gh[:, H:2 * H])
    n = jnp.tanh(gi[:, 2 * H:] + r * gh[:, 2 * H:])
    h_new = (1 - z) * n + z * h
    out = h_new @ p["W_out"].T + p["b_out"]
    return out, h_new, aw


if __name__ == "__main__":
    hidden_size, output_size, max_length = 32, 16, 8
    batch, T = 8, 6   # batch=8 -> full sublane occupancy

    key = jax.random.PRNGKey(0)
    kp, k1, k2, k3, k4 = jax.random.split(key, 5)
    params = init_params(kp, hidden_size, output_size, max_length)
    packed = pack_params(params, hidden_size, output_size, max_length, batch)  # once

    f_input = jax.random.normal(k1, (batch, output_size), jnp.float32)
    hidden = jax.random.normal(k2, (1, batch, hidden_size), jnp.float32)
    encoder_outputs = jax.random.normal(k3, (max_length, hidden_size), jnp.float32)
    encoder_output = jnp.zeros((batch, hidden_size), jnp.float32)  # unused by forward

    # --- single step (matches AttnDecoderRNN.forward) ---
    out, h_new, attn_w = attn_decoder_forward(
        packed, f_input, hidden, encoder_output, encoder_outputs,
        hidden_size, output_size, max_length)
    jax.block_until_ready((out, h_new, attn_w))

    # Tolerances relaxed vs f32 exact because the kernel uses the EUP approx
    # reciprocal for the softmax denominator (test artifact, not a kernel bug).
    r_out, r_h, r_aw = reference_step(params, f_input, hidden[0], encoder_outputs,
                                      hidden_size, output_size, max_length)
    assert np.allclose(out, r_out, atol=1e-2, rtol=1e-2)
    assert np.allclose(h_new[0], r_h, atol=1e-2, rtol=1e-2)
    assert np.allclose(attn_w, r_aw, atol=1e-2, rtol=1e-2)

    # --- fused T-step decode (one pallas_call, everything VMEM-resident) ---
    # TODO(synk): real greedy decoding feeds the embedding of the previously generated
    # token; here the per-step inputs are supplied up-front (teacher-forcing style).
    f_inputs = jax.random.normal(k4, (T, batch, output_size), jnp.float32)
    outs, h_last, attn_ws = attn_decoder_decode(
        packed, f_inputs, hidden, encoder_outputs,
        hidden_size, output_size, max_length)
    jax.block_until_ready((outs, h_last, attn_ws))

    h_ref = hidden[0]
    for t in range(T):
        o_t, h_ref, aw_t = reference_step(params, f_inputs[t], h_ref, encoder_outputs,
                                          hidden_size, output_size, max_length)
        assert np.allclose(outs[t], o_t, atol=1e-2, rtol=1e-2)
        assert np.allclose(attn_ws[t], aw_t, atol=1e-2, rtol=1e-2)
    assert np.allclose(h_last[0], h_ref, atol=1e-2, rtol=1e-2)

    print("KERNEL_OK")
</pallas_src>

<mosaic_0001>
module attributes {stable_mosaic.version = 11 : i64} {
  func.func @attn_decoder_kernel(%arg0: memref<8x16xf32, #tpu.memory_space<vmem>>, %arg1: memref<8x32xf32, #tpu.memory_space<vmem>>, %arg2: memref<8x32xf32, #tpu.memory_space<vmem>>, %arg3: memref<16x40xf32, #tpu.memory_space<vmem>>, %arg4: memref<32x104xf32, #tpu.memory_space<vmem>>, %arg5: memref<32x32xf32, #tpu.memory_space<vmem>>, %arg6: memref<32x96xf32, #tpu.memory_space<vmem>>, %arg7: memref<32x16xf32, #tpu.memory_space<vmem>>, %arg8: memref<8x512xf32, #tpu.memory_space<vmem>>, %arg9: memref<8x16xf32, #tpu.memory_space<vmem>>, %arg10: memref<8x32xf32, #tpu.memory_space<vmem>>, %arg11: memref<8x8xf32, #tpu.memory_space<vmem>>) attributes {dimension_semantics = [], scalar_prefetch = 0 : i64, scratch_operands = 0 : i64, tpu.core_type = #tpu.core_type<tc>} {
    %c0 = arith.constant 0 : index
    %c0_0 = arith.constant 0 : index
    %0 = vector.load %arg0[%c0, %c0_0] : memref<8x16xf32, #tpu.memory_space<vmem>>, vector<8x16xf32>
    %c0_1 = arith.constant 0 : index
    %c0_2 = arith.constant 0 : index
    %1 = vector.load %arg1[%c0_1, %c0_2] : memref<8x32xf32, #tpu.memory_space<vmem>>, vector<8x32xf32>
    %c0_3 = arith.constant 0 : index
    %c0_4 = arith.constant 0 : index
    %2 = vector.load %arg2[%c0_3, %c0_4] : memref<8x32xf32, #tpu.memory_space<vmem>>, vector<8x32xf32>
    %c0_5 = arith.constant 0 : index
    %c0_6 = arith.constant 0 : index
    %3 = vector.load %arg3[%c0_5, %c0_6] : memref<16x40xf32, #tpu.memory_space<vmem>>, vector<16x40xf32>
    %c0_7 = arith.constant 0 : index
    %c0_8 = arith.constant 0 : index
    %4 = vector.load %arg4[%c0_7, %c0_8] : memref<32x104xf32, #tpu.memory_space<vmem>>, vector<32x104xf32>
    %c0_9 = arith.constant 0 : index
    %c0_10 = arith.constant 0 : index
    %5 = vector.load %arg5[%c0_9, %c0_10] : memref<32x32xf32, #tpu.memory_space<vmem>>, vector<32x32xf32>
    %c0_11 = arith.constant 0 : index
    %c0_12 = arith.constant 0 : index
    %6 = vector.load %arg6[%c0_11, %c0_12] : memref<32x96xf32, #tpu.memory_space<vmem>>, vector<32x96xf32>
    %c0_13 = arith.constant 0 : index
    %c0_14 = arith.constant 0 : index
    %7 = vector.load %arg7[%c0_13, %c0_14] : memref<32x16xf32, #tpu.memory_space<vmem>>, vector<32x16xf32>
    %c0_15 = arith.constant 0 : index
    %c0_16 = arith.constant 0 : index
    %8 = vector.load %arg8[%c0_15, %c0_16] : memref<8x512xf32, #tpu.memory_space<vmem>>, vector<8x512xf32>
    %9 = vector.extract_strided_slice %8 {offsets = [0, 0], sizes = [8, 40], strides = [1, 1]} : vector<8x512xf32> to vector<8x40xf32>
    %10 = vector.extract_strided_slice %8 {offsets = [0, 128], sizes = [8, 104], strides = [1, 1]} : vector<8x512xf32> to vector<8x104xf32>
    %11 = vector.extract_strided_slice %8 {offsets = [0, 256], sizes = [8, 96], strides = [1, 1]} : vector<8x512xf32> to vector<8x96xf32>
    %12 = vector.extract_strided_slice %8 {offsets = [0, 384], sizes = [8, 16], strides = [1, 1]} : vector<8x512xf32> to vector<8x16xf32>
    %cst = arith.constant dense<0.000000e+00> : vector<8x40xf32>
    %13 = tpu.matmul %0, %3, %cst {dimension_numbers = #tpu.dot_dimension_numbers<[1], [0], [0], [1], [0, 0, 1, 1], [], []>} : vector<8x16xf32>, vector<16x40xf32>, vector<8x40xf32> -> vector<8x40xf32>
    %14 = arith.addf %13, %9 : vector<8x40xf32>
    %cst_17 = arith.constant dense<0.000000e+00> : vector<8x104xf32>
    %15 = tpu.matmul %1, %4, %cst_17 {dimension_numbers = #tpu.dot_dimension_numbers<[1], [0], [0], [1], [0, 0, 1, 1], [], []>} : vector<8x32xf32>, vector<32x104xf32>, vector<8x104xf32> -> vector<8x104xf32>
    %16 = arith.addf %15, %10 : vector<8x104xf32>
    %17 = vector.extract_strided_slice %14 {offsets = [0, 0], sizes = [8, 8], strides = [1, 1]} : vector<8x40xf32> to vector<8x8xf32>
    %18 = vector.extract_strided_slice %16 {offsets = [0, 0], sizes = [8, 8], strides = [1, 1]} : vector<8x104xf32> to vector<8x8xf32>
    %19 = arith.addf %17, %18 : vector<8x8xf32>
    %cst_18 = arith.constant dense<0xFF800000> : vector<8xf32>
    %20 = vector.multi_reduction <maximumf>, %19, %cst_18 [1] : vector<8x8xf32> to vector<8xf32>
    %21 = vector.shape_cast %20 : vector<8xf32> to vector<8x1xf32>
    %22 = vector.broadcast %21 : vector<8x1xf32> to vector<8x8xf32>
    %23 = arith.subf %19, %22 : vector<8x8xf32>
    %24 = math.exp %23 : vector<8x8xf32>
    %cst_19 = arith.constant dense<0.000000e+00> : vector<8xf32>
    %25 = vector.multi_reduction <add>, %24, %cst_19 [1] : vector<8x8xf32> to vector<8xf32>
    %26 = vector.shape_cast %25 : vector<8xf32> to vector<8x1xf32>
    %27 = tpu.reciprocal %26 {approx = true} : vector<8x1xf32> -> vector<8x1xf32>
    %28 = vector.broadcast %27 : vector<8x1xf32> to vector<8x8xf32>
    %29 = arith.mulf %24, %28 : vector<8x8xf32>
    %cst_20 = arith.constant dense<0.000000e+00> : vector<8x32xf32>
    %30 = tpu.matmul %29, %2, %cst_20 {dimension_numbers = #tpu.dot_dimension_numbers<[1], [0], [0], [1], [0, 0, 1, 1], [], []>} : vector<8x8xf32>, vector<8x32xf32>, vector<8x32xf32> -> vector<8x32xf32>
    %31 = vector.extract_strided_slice %14 {offsets = [0, 8], sizes = [8, 32], strides = [1, 1]} : vector<8x40xf32> to vector<8x32xf32>
    %cst_21 = arith.constant dense<0.000000e+00> : vector<8x32xf32>
    %32 = tpu.matmul %30, %5, %cst_21 {dimension_numbers = #tpu.dot_dimension_numbers<[1], [0], [0], [1], [0, 0, 1, 1], [], []>} : vector<8x32xf32>, vector<32x32xf32>, vector<8x32xf32> -> vector<8x32xf32>
    %33 = arith.addf %31, %32 : vector<8x32xf32>
    %cst_22 = arith.constant 0.000000e+00 : f32
    %34 = vector.broadcast %cst_22 : f32 to vector<8x32xf32>
    %35 = arith.maximumf %33, %34 : vector<8x32xf32>
    %cst_23 = arith.constant dense<0.000000e+00> : vector<8x96xf32>
    %36 = tpu.matmul %35, %6, %cst_23 {dimension_numbers = #tpu.dot_dimension_numbers<[1], [0], [0], [1], [0, 0, 1, 1], [], []>} : vector<8x32xf32>, vector<32x96xf32>, vector<8x96xf32> -> vector<8x96xf32>
    %37 = arith.addf %36, %11 : vector<8x96xf32>
    %38 = vector.extract_strided_slice %16 {offsets = [0, 8], sizes = [8, 96], strides = [1, 1]} : vector<8x104xf32> to vector<8x96xf32>
    %39 = vector.extract_strided_slice %37 {offsets = [0, 0], sizes = [8, 64], strides = [1, 1]} : vector<8x96xf32> to vector<8x64xf32>
    %40 = vector.extract_strided_slice %38 {offsets = [0, 0], sizes = [8, 64], strides = [1, 1]} : vector<8x96xf32> to vector<8x64xf32>
    %41 = arith.addf %39, %40 : vector<8x64xf32>
    %42 = arith.negf %41 : vector<8x64xf32>
    %43 = math.exp %42 : vector<8x64xf32>
    %cst_24 = arith.constant 1.000000e+00 : f32
    %44 = vector.broadcast %cst_24 : f32 to vector<8x64xf32>
    %45 = arith.addf %44, %43 : vector<8x64xf32>
    %46 = arith.divf %44, %45 : vector<8x64xf32>
    %47 = vector.extract_strided_slice %46 {offsets = [0, 0], sizes = [8, 32], strides = [1, 1]} : vector<8x64xf32> to vector<8x32xf32>
    %48 = vector.extract_strided_slice %46 {offsets = [0, 32], sizes = [8, 32], strides = [1, 1]} : vector<8x64xf32> to vector<8x32xf32>
    %49 = vector.extract_strided_slice %37 {offsets = [0, 64], sizes = [8, 32], strides = [1, 1]} : vector<8x96xf32> to vector<8x32xf32>
    %50 = vector.extract_strided_slice %38 {offsets = [0, 64], sizes = [8, 32], strides = [1, 1]} : vector<8x96xf32> to vector<8x32xf32>
    %51 = arith.mulf %47, %50 : vector<8x32xf32>
    %52 = arith.addf %49, %51 : vector<8x32xf32>
    %53 = math.tanh %52 : vector<8x32xf32>
    %cst_25 = arith.constant 1.000000e+00 : f32
    %54 = vector.broadcast %cst_25 : f32 to vector<8x32xf32>
    %55 = arith.subf %54, %48 : vector<8x32xf32>
    %56 = arith.mulf %55, %53 : vector<8x32xf32>
    %57 = arith.mulf %48, %1 : vector<8x32xf32>
    %58 = arith.addf %56, %57 : vector<8x32xf32>
    %cst_26 = arith.constant dense<0.000000e+00> : vector<8x16xf32>
    %59 = tpu.matmul %58, %7, %cst_26 {dimension_numbers = #tpu.dot_dimension_numbers<[1], [0], [0], [1], [0, 0, 1, 1], [], []>} : vector<8x32xf32>, vector<32x16xf32>, vector<8x16xf32> -> vector<8x16xf32>
    %60 = arith.addf %59, %12 : vector<8x16xf32>
    %c0_27 = arith.constant 0 : index
    %c0_28 = arith.constant 0 : index
    %61 = vector.load %arg9[%c0_27, %c0_28] : memref<8x16xf32, #tpu.memory_space<vmem>>, vector<8x16xf32>
    tpu.vector_store %arg9[%c0_27, %c0_28], %60 {strides = array<i32>} : memref<8x16xf32, #tpu.memory_space<vmem>>, vector<8x16xf32>,
    %c0_29 = arith.constant 0 : index
    %c0_30 = arith.constant 0 : index
    %62 = vector.load %arg10[%c0_29, %c0_30] : memref<8x32xf32, #tpu.memory_space<vmem>>, vector<8x32xf32>
    tpu.vector_store %arg10[%c0_29, %c0_30], %58 {strides = array<i32>} : memref<8x32xf32, #tpu.memory_space<vmem>>, vector<8x32xf32>,
    %c0_31 = arith.constant 0 : index
    %c0_32 = arith.constant 0 : index
    %63 = vector.load %arg11[%c0_31, %c0_32] : memref<8x8xf32, #tpu.memory_space<vmem>>, vector<8x8xf32>
    tpu.vector_store %arg11[%c0_31, %c0_32], %29 {strides = array<i32>} : memref<8x8xf32, #tpu.memory_space<vmem>>, vector<8x8xf32>,
    return
  }
}

</mosaic_0001>

<llo_original>
// kernel: tpu_custom_call.1
$region0: #{tpu_custom_call.1}
  #allocation0 [shape = 'u32[]', space=smem, size = 0x4, offset = 0x4, fixed_abs, tag = 'smem constant byte address 0x4 - core index']
  #allocation1 [shape = 'u32[144,128]{1,0:T(1,128)}', space=vmem, size = 0x12000, scoped, tag = 'internal scratch']
  %s0 = inlined_call_operand.hbm [shape: f32[8,16], index: 0, kind: input, shape index: {}]
  %s1 = inlined_call_operand.hbm [shape: f32[8,32], index: 1, kind: input, shape index: {}]
  %s2 = inlined_call_operand.hbm [shape: f32[8,32], index: 2, kind: input, shape index: {}]
  %s3 = inlined_call_operand.vmem [shape: f32[16,40], index: 3, kind: input, shape index: {}]
  %s4 = inlined_call_operand.vmem [shape: f32[32,104], index: 4, kind: input, shape index: {}]
  %s5 = inlined_call_operand.hbm [shape: f32[32,32], index: 5, kind: input, shape index: {}]
  %s6 = inlined_call_operand.hbm [shape: f32[32,96], index: 6, kind: input, shape index: {}]
  %s7 = inlined_call_operand.vmem [shape: f32[32,16], index: 7, kind: input, shape index: {}]
  %s8 = inlined_call_operand.hbm [shape: f32[8,512], index: 8, kind: input, shape index: {}]
  %s9 = inlined_call_operand.hbm [shape: f32[8,16], index: 9, kind: output, shape index: {0}]
  %s10 = inlined_call_operand.hbm [shape: f32[8,32], index: 10, kind: output, shape index: {1}]
  %s11 = inlined_call_operand.hbm [shape: f32[8,8], index: 11, kind: output, shape index: {2}]
  %12 = xla_tuple %s9, %s10, %s11
  %s13 = sld [smem:[#allocation0]]
  $region86: #{tpu_custom_call.1} parent=0
    _
  %s15 = ssub.s32 1, %s13
  %s16 = scalar_select 0, %s15, %s13
  $region1: #{tpu_custom_call.1} parent=0
    #allocation2 [shape = 'u8[4096]{0}', space=vmem, size = 0x1000, scoped, tag = 'input window, operand 0, single buffered']
    #allocation3 [shape = 's32[1]{0}', space=sflag, size = 0x4, scoped, tag = 'scoped memory for tpu_custom_call.1']
    #allocation4 [shape = 's32[1]{0}', space=sflag, size = 0x4, scoped, tag = 'scoped memory for tpu_custom_call.1']
    #allocation5 [shape = 'u8[4096]{0}', space=vmem, size = 0x1000, scoped, tag = 'input window, operand 1, single buffered']
    #allocation6 [shape = 's32[1]{0}', space=sflag, size = 0x4, scoped, tag = 'scoped memory for tpu_custom_call.1']
    #allocation7 [shape = 'u8[4096]{0}', space=vmem, size = 0x1000, scoped, tag = 'input window, operand 2, single buffered']
    #allocation8 [shape = 'u8[16384]{0}', space=vmem, size = 0x4000, scoped, tag = 'input window, operand 5, single buffered']
    #allocation9 [shape = 's32[1]{0}', space=sflag, size = 0x4, scoped, tag = 'scoped memory for tpu_custom_call.1']
    #allocation10 [shape = 'u8[16384]{0}', space=vmem, size = 0x4000, scoped, tag = 'input window, operand 6, single buffered']
    #allocation11 [shape = 'u8[16384]{0}', space=vmem, size = 0x4000, scoped, tag = 'input window, operand 8, single buffered']
    #allocation12 [shape = 's32[1]{0}', space=sflag, size = 0x4, scoped, tag = 'scoped memory for tpu_custom_call.1']
    #allocation13 [shape = 'u8[4096]{0}', space=vmem, size = 0x1000, scoped, tag = 'output window, operand 0, single buffered']
    #allocation14 [shape = 'u8[4096]{0}', space=vmem, size = 0x1000, scoped, tag = 'output window, operand 1, single buffered']
    #allocation15 [shape = 's32[1]{0}', space=sflag, size = 0x4, scoped, tag = 'scoped memory for tpu_custom_call.1']
    #allocation16 [shape = 'u8[4096]{0}', space=vmem, size = 0x1000, scoped, tag = 'output window, operand 2, single buffered']
    %17 = vsyncpa [#allocation3], 0
    %18 = vsyncpa [#allocation6], 0
    %19 = vsyncpa [#allocation9], 0
    %20 = vsyncpa [#allocation12], 0
    %21 = vsyncpa [#allocation4], 0
    %22 = vsyncpa [#allocation15], 0
    // Predicated region
    $region2: #{tpu_custom_call.1} parent=1 // pred_check
      _
    $region3: #{tpu_custom_call.1} parent=1 // pred_check_branch
      %24 = sbr.rel (0) target = $region5
    $region4: #{tpu_custom_call.1} parent=1 // pred_region
      %s26 = ssub.s32 128, 128
      %27 = vsyncadd [#allocation3], %s26
      %s29 = sshll.u32 [#allocation2], 4
      %s30 = int_to_ptr.vmem [resolvable:$true] %s29
      %32 = dma.hbm_to_vmem [thread:$0]  %s0, 128, %s30, [#allocation3]
    $region5: #{tpu_custom_call.1} parent=1 // pred_fallthru
      _
    // Predicated region
    $region6: #{tpu_custom_call.1} parent=1 // pred_check
      _
    $region7: #{tpu_custom_call.1} parent=1 // pred_check_branch
      %34 = sbr.rel (0) target = $region9
    $region8: #{tpu_custom_call.1} parent=1 // pred_region
      %s36 = ssub.s32 128, 128
      %37 = vsyncadd [#allocation6], %s36
      %s39 = sshll.u32 [#allocation5], 4
      %s40 = int_to_ptr.vmem [resolvable:$true] %s39
      %42 = dma.hbm_to_vmem [thread:$0]  %s1, 128, %s40, [#allocation6]
    $region9: #{tpu_custom_call.1} parent=1 // pred_fallthru
      _
    // Predicated region
    $region10: #{tpu_custom_call.1} parent=1 // pred_check
      _
    $region11: #{tpu_custom_call.1} parent=1 // pred_check_branch
      %44 = sbr.rel (0) target = $region13
    $region12: #{tpu_custom_call.1} parent=1 // pred_region
      %s46 = ssub.s32 128, 128
      %47 = vsyncadd [#allocation6], %s46
      %s49 = sshll.u32 [#allocation7], 4
      %s50 = int_to_ptr.vmem [resolvable:$true] %s49
      %52 = dma.hbm_to_vmem [thread:$0]  %s2, 128, %s50, [#allocation6]
    $region13: #{tpu_custom_call.1} parent=1 // pred_fallthru
      _
    // Predicated region
    $region14: #{tpu_custom_call.1} parent=1 // pred_check
      _
    $region15: #{tpu_custom_call.1} parent=1 // pred_check_branch
      %54 = sbr.rel (0) target = $region17
    $region16: #{tpu_custom_call.1} parent=1 // pred_region
      _
    $region17: #{tpu_custom_call.1} parent=1 // pred_fallthru
      _
    // Predicated region
    $region18: #{tpu_custom_call.1} parent=1 // pred_check
      _
    $region19: #{tpu_custom_call.1} parent=1 // pred_check_branch
      %56 = sbr.rel (0) target = $region21
    $region20: #{tpu_custom_call.1} parent=1 // pred_region
      _
    $region21: #{tpu_custom_call.1} parent=1 // pred_fallthru
      _
    // Predicated region
    $region22: #{tpu_custom_call.1} parent=1 // pred_check
      _
    $region23: #{tpu_custom_call.1} parent=1 // pred_check_branch
      %58 = sbr.rel (0) target = $region25
    $region24: #{tpu_custom_call.1} parent=1 // pred_region
      %s60 = ssub.s32 512, 512
      %61 = vsyncadd [#allocation9], %s60
      %s62 = sshll.u32 [#allocation8], 4
      %s63 = int_to_ptr.vmem [resolvable:$true] %s62
      %68 = dma.hbm_to_vmem [thread:$0]  %s5, 512, %s63, [#allocation9], 128, 128, 8
    $region25: #{tpu_custom_call.1} parent=1 // pred_fallthru
      _
    // Predicated region
    $region26: #{tpu_custom_call.1} parent=1 // pred_check
      _
    $region27: #{tpu_custom_call.1} parent=1 // pred_check_branch
      %70 = sbr.rel (0) target = $region29
    $region28: #{tpu_custom_call.1} parent=1 // pred_region
      %s72 = ssub.s32 512, 512
      %73 = vsyncadd [#allocation9], %s72
      %s74 = sshll.u32 [#allocation10], 4
      %s75 = int_to_ptr.vmem [resolvable:$true] %s74
      %80 = dma.hbm_to_vmem [thread:$0]  %s6, 512, %s75, [#allocation9], 128, 128, 8
    $region29: #{tpu_custom_call.1} parent=1 // pred_fallthru
      _
    // Predicated region
    $region30: #{tpu_custom_call.1} parent=1 // pred_check
      _
    $region31: #{tpu_custom_call.1} parent=1 // pred_check_branch
      %82 = sbr.rel (0) target = $region33
    $region32: #{tpu_custom_call.1} parent=1 // pred_region
      _
    $region33: #{tpu_custom_call.1} parent=1 // pred_fallthru
      _
    // Predicated region
    $region34: #{tpu_custom_call.1} parent=1 // pred_check
      _
    $region35: #{tpu_custom_call.1} parent=1 // pred_check_branch
      %84 = sbr.rel (0) target = $region37
    $region36: #{tpu_custom_call.1} parent=1 // pred_region
      %s86 = ssub.s32 512, 512
      %87 = vsyncadd [#allocation12], %s86
      %s89 = sshll.u32 [#allocation11], 4
      %s90 = int_to_ptr.vmem [resolvable:$true] %s89
      %92 = dma.hbm_to_vmem [thread:$0]  %s8, 512, %s90, [#allocation12]
    $region37: #{tpu_custom_call.1} parent=1 // pred_fallthru
      _
    // Predicated region
    $region38: #{tpu_custom_call.1} parent=1 // pred_check
      _
    $region39: #{tpu_custom_call.1} parent=1 // pred_check_branch
      %94 = sbr.rel (0) target = $region41
    $region40: #{tpu_custom_call.1} parent=1 // pred_region
      %95 = dma.done [#allocation3], 128
    $region41: #{tpu_custom_call.1} parent=1 // pred_fallthru
      _
    // Predicated region
    $region42: #{tpu_custom_call.1} parent=1 // pred_check
      _
    $region43: #{tpu_custom_call.1} parent=1 // pred_check_branch
      %97 = sbr.rel (0) target = $region45
    $region44: #{tpu_custom_call.1} parent=1 // pred_region
      %98 = dma.done [#allocation6], 128
    $region45: #{tpu_custom_call.1} parent=1 // pred_fallthru
      _
    // Predicated region
    $region46: #{tpu_custom_call.1} parent=1 // pred_check
      _
    $region47: #{tpu_custom_call.1} parent=1 // pred_check_branch
      %100 = sbr.rel (0) target = $region49
    $region48: #{tpu_custom_call.1} parent=1 // pred_region
      %101 = dma.done [#allocation6], 128
    $region49: #{tpu_custom_call.1} parent=1 // pred_fallthru
      _
    // Predicated region
    $region50: #{tpu_custom_call.1} parent=1 // pred_check
      _
    $region51: #{tpu_custom_call.1} parent=1 // pred_check_branch
      %103 = sbr.rel (0) target = $region53
    $region52: #{tpu_custom_call.1} parent=1 // pred_region
      %104 = dma.done [#allocation9], 512
    $region53: #{tpu_custom_call.1} parent=1 // pred_fallthru
      _
    // Predicated region
    $region54: #{tpu_custom_call.1} parent=1 // pred_check
      _
    $region55: #{tpu_custom_call.1} parent=1 // pred_check_branch
      %106 = sbr.rel (0) target = $region57
    $region56: #{tpu_custom_call.1} parent=1 // pred_region
      %107 = dma.done [#allocation9], 512
    $region57: #{tpu_custom_call.1} parent=1 // pred_fallthru
      _
    // Predicated region
    $region58: #{tpu_custom_call.1} parent=1 // pred_check
      _
    $region59: #{tpu_custom_call.1} parent=1 // pred_check_branch
      %109 = sbr.rel (0) target = $region61
    $region60: #{tpu_custom_call.1} parent=1 // pred_region
      %110 = dma.done [#allocation12], 512
    $region61: #{tpu_custom_call.1} parent=1 // pred_fallthru
      _
    %v111 = vld [vmem:[#allocation2] sm:$0xff]
    %v112 = vld [vmem:[#allocation5] sm:$0xff]
    %v113 = vld [vmem:[#allocation7] sm:$0xff]
    %v114 = vld [vmem:[%s3] sm:$0xff]
    %v115 = vld [vmem:[%s3 + $0x8] sm:$0xff]
    %v116 = vld [vmem:[%s4] sm:$0xff]
    %v117 = vld [vmem:[%s4 + $0x8] sm:$0xff]
    %v118 = vld [vmem:[%s4 + $0x10] sm:$0xff]
    %v119 = vld [vmem:[%s4 + $0x18] sm:$0xff]
    %v120 = vld [vmem:[#allocation8] sm:$0xff]
    %v121 = vld [vmem:[#allocation8 + $0x8] sm:$0xff]
    %v122 = vld [vmem:[#allocation8 + $0x10] sm:$0xff]
    %v123 = vld [vmem:[#allocation8 + $0x18] sm:$0xff]
    %v124 = vld [vmem:[#allocation10] sm:$0xff]
    %v125 = vld [vmem:[#allocation10 + $0x8] sm:$0xff]
    %v126 = vld [vmem:[#allocation10 + $0x10] sm:$0xff]
    %v127 = vld [vmem:[#allocation10 + $0x18] sm:$0xff]
    %v128 = vld [vmem:[%s7] sm:$0xff]
    %v129 = vld [vmem:[%s7 + $0x8] sm:$0xff]
    %v130 = vld [vmem:[%s7 + $0x10] sm:$0xff]
    %v131 = vld [vmem:[%s7 + $0x18] sm:$0xff]
    %v132 = vld [vmem:[#allocation11] sm:$0xff]
    %v133 = vld [vmem:[#allocation11 + $0x8] sm:$0xff]
    %v134 = vld [vmem:[#allocation11 + $0x10] sm:$0xff]
    %v135 = vld [vmem:[#allocation11 + $0x18] sm:$0xff]
    %vm136 = vcmask 130048
    %v138 = vsel %vm136, %v111, 0
    %140 = vmatprep.subr.mxu0 0.0
    %141 = vmatpush1.msra.mxu0 0.0
    %142 = vmatprep.subr.mxu0 0.0
    %143 = vmatpush1.msra.mxu0 0.0
    %144 = vmatprep.subr.mxu0 0.0
    %145 = vmatpush1.msra.mxu0 0.0
    %146 = vmatprep.subr.mxu0 0.0
    %147 = vmatpush1.msra.mxu0 0.0
    %148 = vmatprep.subr.mxu0 0.0
    %149 = vmatpush1.msra.mxu0 0.0
    %150 = vmatprep.subr.mxu0 0.0
    %151 = vmatpush1.msra.mxu0 0.0
    %152 = vmatprep.subr.mxu0 0.0
    %153 = vmatpush1.msra.mxu0 0.0
    %154 = vmatprep.subr.mxu0 0.0
    %155 = vmatpush1.msra.mxu0 0.0
    %156 = vmatprep.subr.mxu0 0.0
    %157 = vmatpush1.msra.mxu0 0.0
    %158 = vmatprep.subr.mxu0 0.0
    %159 = vmatpush1.msra.mxu0 0.0
    %160 = vmatprep.subr.mxu0 0.0
    %161 = vmatpush1.msra.mxu0 0.0
    %162 = vmatprep.subr.mxu0 0.0
    %163 = vmatpush1.msra.mxu0 0.0
    %164 = vmatprep.subr.mxu0 0.0
    %165 = vmatpush1.msra.mxu0 0.0
    %166 = vmatprep.subr.mxu0 0.0
    %167 = vmatpush1.msra.mxu0 0.0
    %168 = vmatprep.subr.mxu0 0.0
    %169 = vmatpush1.msra.mxu0 %v115
    %170 = vmatprep.subr.mxu0 0.0
    %171 = vmatpush1.msra.mxu0 %v114
    %172 = vmatprep.subr.mxu0 0.0
    %173 = vmatpush2.msra.mxu0 0.0
    %174 = vmatprep.subr.mxu0 0.0
    %175 = vmatpush2.msra.mxu0 0.0
    %176 = vmatprep.subr.mxu0 0.0
    %177 = vmatpush2.msra.mxu0 0.0
    %178 = vmatprep.subr.mxu0 0.0
    %179 = vmatpush2.msra.mxu0 0.0
    %180 = vmatprep.subr.mxu0 0.0
    %181 = vmatpush2.msra.mxu0 0.0
    %182 = vmatprep.subr.mxu0 0.0
    %183 = vmatpush2.msra.mxu0 0.0
    %184 = vmatprep.subr.mxu0 0.0
    %185 = vmatpush2.msra.mxu0 0.0
    %186 = vmatprep.subr.mxu0 0.0
    %187 = vmatpush2.msra.mxu0 0.0
    %188 = vmatprep.subr.mxu0 0.0
    %189 = vmatpush2.msra.mxu0 0.0
    %190 = vmatprep.subr.mxu0 0.0
    %191 = vmatpush2.msra.mxu0 0.0
    %192 = vmatprep.subr.mxu0 0.0
    %193 = vmatpush2.msra.mxu0 0.0
    %194 = vmatprep.subr.mxu0 0.0
    %195 = vmatpush2.msra.mxu0 0.0
    %196 = vmatprep.subr.mxu0 0.0
    %197 = vmatpush2.msra.mxu0 0.0
    %198 = vmatprep.subr.mxu0 0.0
    %199 = vmatpush2.msra.mxu0 0.0
    %200 = vmatprep.subr.mxu0 0.0
    %201 = vmatpush2.msra.mxu0 0.0
    %202 = vmatprep.subr.mxu0 0.0
    %203 = vmatpush2.msra.mxu0 0.0
    %204 = vmatprep.mubr.f32.mxu0 0.0
    %205 = vmatmul.mubr.f32.gmra.mxu0 %v138
    %v206 = vpop.f32.mrf.mxu0
    %v207 = vadd.f32 %v132, %v206
    %v208 = vpop.f32.mrf.mxu0
    %209 = vdwg.mxu0
    %vm210 = vcmask 261120
    %v212 = vsel %vm210, %v112, 0
    %214 = vmatprep.subr.mxu0 0.0
    %215 = vmatpush1.msra.mxu0 0.0
    %216 = vmatprep.subr.mxu0 0.0
    %217 = vmatpush1.msra.mxu0 0.0
    %218 = vmatprep.subr.mxu0 0.0
    %219 = vmatpush1.msra.mxu0 0.0
    %220 = vmatprep.subr.mxu0 0.0
    %221 = vmatpush1.msra.mxu0 0.0
    %222 = vmatprep.subr.mxu0 0.0
    %223 = vmatpush1.msra.mxu0 0.0
    %224 = vmatprep.subr.mxu0 0.0
    %225 = vmatpush1.msra.mxu0 0.0
    %226 = vmatprep.subr.mxu0 0.0
    %227 = vmatpush1.msra.mxu0 0.0
    %228 = vmatprep.subr.mxu0 0.0
    %229 = vmatpush1.msra.mxu0 0.0
    %230 = vmatprep.subr.mxu0 0.0
    %231 = vmatpush1.msra.mxu0 0.0
    %232 = vmatprep.subr.mxu0 0.0
    %233 = vmatpush1.msra.mxu0 0.0
    %234 = vmatprep.subr.mxu0 0.0
    %235 = vmatpush1.msra.mxu0 0.0
    %236 = vmatprep.subr.mxu0 0.0
    %237 = vmatpush1.msra.mxu0 0.0
    %238 = vmatprep.subr.mxu0 0.0
    %239 = vmatpush1.msra.mxu0 %v119
    %240 = vmatprep.subr.mxu0 0.0
    %241 = vmatpush1.msra.mxu0 %v118
    %242 = vmatprep.subr.mxu0 0.0
    %243 = vmatpush1.msra.mxu0 %v117
    %244 = vmatprep.subr.mxu0 0.0
    %245 = vmatpush1.msra.mxu0 %v116
    %246 = vmatprep.subr.mxu0 0.0
    %247 = vmatpush2.msra.mxu0 0.0
    %248 = vmatprep.subr.mxu0 0.0
    %249 = vmatpush2.msra.mxu0 0.0
    %250 = vmatprep.subr.mxu0 0.0
    %251 = vmatpush2.msra.mxu0 0.0
    %252 = vmatprep.subr.mxu0 0.0
    %253 = vmatpush2.msra.mxu0 0.0
    %254 = vmatprep.subr.mxu0 0.0
    %255 = vmatpush2.msra.mxu0 0.0
    %256 = vmatprep.subr.mxu0 0.0
    %257 = vmatpush2.msra.mxu0 0.0
    %258 = vmatprep.subr.mxu0 0.0
    %259 = vmatpush2.msra.mxu0 0.0
    %260 = vmatprep.subr.mxu0 0.0
    %261 = vmatpush2.msra.mxu0 0.0
    %262 = vmatprep.subr.mxu0 0.0
    %263 = vmatpush2.msra.mxu0 0.0
    %264 = vmatprep.subr.mxu0 0.0
    %265 = vmatpush2.msra.mxu0 0.0
    %266 = vmatprep.subr.mxu0 0.0
    %267 = vmatpush2.msra.mxu0 0.0
    %268 = vmatprep.subr.mxu0 0.0
    %269 = vmatpush2.msra.mxu0 0.0
    %270 = vmatprep.subr.mxu0 0.0
    %271 = vmatpush2.msra.mxu0 0.0
    %272 = vmatprep.subr.mxu0 0.0
    %273 = vmatpush2.msra.mxu0 0.0
    %274 = vmatprep.subr.mxu0 0.0
    %275 = vmatpush2.msra.mxu0 0.0
    %276 = vmatprep.subr.mxu0 0.0
    %277 = vmatpush2.msra.mxu0 0.0
    %278 = vmatprep.mubr.f32.mxu0 0.0
    %279 = vmatmul.mubr.f32.gmra.mxu0 %v212
    %v280 = vpop.f32.mrf.mxu0
    %v281 = vadd.f32 %v133, %v280
    %v282 = vpop.f32.mrf.mxu0
    %283 = vdwg.mxu0
    %v284 = vadd.f32 %v207, %v281
    %vm285 = vcmask 64512
    %v286 = vsel %vm285, %v284, -inf
    %287 = vmax.xlane.f32.xlu0 %v286
    %v288 = vpop.xlane.xlu0 %287
    %v289 = vsub.f32 %v284, %v288
    %v290 = vmul.f32 %v289, 1.442695
    %v291 = vpow.pop %v290
    %v292 = vsel %vm285, %v291, 0.0
    %293 = vadd.xlane.f32.xlu0 %v292
    %v294 = vpop.xlane.xlu0 %293
    %v295 = vrcp.pop %v294
    %v296 = vmul.f32 %v291, %v295
    %v298 = vsel %vm285, %v296, 0
    %300 = vmatprep.subr.mxu0 0.0
    %301 = vmatpush1.msra.mxu0 0.0
    %302 = vmatprep.subr.mxu0 0.0
    %303 = vmatpush1.msra.mxu0 0.0
    %304 = vmatprep.subr.mxu0 0.0
    %305 = vmatpush1.msra.mxu0 0.0
    %306 = vmatprep.subr.mxu0 0.0
    %307 = vmatpush1.msra.mxu0 0.0
    %308 = vmatprep.subr.mxu0 0.0
    %309 = vmatpush1.msra.mxu0 0.0
    %310 = vmatprep.subr.mxu0 0.0
    %311 = vmatpush1.msra.mxu0 0.0
    %312 = vmatprep.subr.mxu0 0.0
    %313 = vmatpush1.msra.mxu0 0.0
    %314 = vmatprep.subr.mxu0 0.0
    %315 = vmatpush1.msra.mxu0 0.0
    %316 = vmatprep.subr.mxu0 0.0
    %317 = vmatpush1.msra.mxu0 0.0
    %318 = vmatprep.subr.mxu0 0.0
    %319 = vmatpush1.msra.mxu0 0.0
    %320 = vmatprep.subr.mxu0 0.0
    %321 = vmatpush1.msra.mxu0 0.0
    %322 = vmatprep.subr.mxu0 0.0
    %323 = vmatpush1.msra.mxu0 0.0
    %324 = vmatprep.subr.mxu0 0.0
    %325 = vmatpush1.msra.mxu0 0.0
    %326 = vmatprep.subr.mxu0 0.0
    %327 = vmatpush1.msra.mxu0 0.0
    %328 = vmatprep.subr.mxu0 0.0
    %329 = vmatpush1.msra.mxu0 0.0
    %330 = vmatprep.subr.mxu0 0.0
    %331 = vmatpush1.msra.mxu0 %v113
    %332 = vmatprep.subr.mxu0 0.0
    %333 = vmatpush2.msra.mxu0 0.0
    %334 = vmatprep.subr.mxu0 0.0
    %335 = vmatpush2.msra.mxu0 0.0
    %336 = vmatprep.subr.mxu0 0.0
    %337 = vmatpush2.msra.mxu0 0.0
    %338 = vmatprep.subr.mxu0 0.0
    %339 = vmatpush2.msra.mxu0 0.0
    %340 = vmatprep.subr.mxu0 0.0
    %341 = vmatpush2.msra.mxu0 0.0
    %342 = vmatprep.subr.mxu0 0.0
    %343 = vmatpush2.msra.mxu0 0.0
    %344 = vmatprep.subr.mxu0 0.0
    %345 = vmatpush2.msra.mxu0 0.0
    %346 = vmatprep.subr.mxu0 0.0
    %347 = vmatpush2.msra.mxu0 0.0
    %348 = vmatprep.subr.mxu0 0.0
    %349 = vmatpush2.msra.mxu0 0.0
    %350 = vmatprep.subr.mxu0 0.0
    %351 = vmatpush2.msra.mxu0 0.0
    %352 = vmatprep.subr.mxu0 0.0
    %353 = vmatpush2.msra.mxu0 0.0
    %354 = vmatprep.subr.mxu0 0.0
    %355 = vmatpush2.msra.mxu0 0.0
    %356 = vmatprep.subr.mxu0 0.0
    %357 = vmatpush2.msra.mxu0 0.0
    %358 = vmatprep.subr.mxu0 0.0
    %359 = vmatpush2.msra.mxu0 0.0
    %360 = vmatprep.subr.mxu0 0.0
    %361 = vmatpush2.msra.mxu0 0.0
    %362 = vmatprep.subr.mxu0 0.0
    %363 = vmatpush2.msra.mxu0 0.0
    %364 = vmatprep.mubr.f32.mxu0 0.0
    %365 = vmatmul.mubr.f32.gmra.mxu0 %v298
    %v366 = vpop.f32.mrf.mxu0
    %v367 = vadd.f32 0.0, %v366
    %v368 = vpop.f32.mrf.mxu0
    %369 = vdwg.mxu0
    %v371 = vsel %vm210, %v367, 0
    %373 = vmatprep.subr.mxu0 0.0
    %374 = vmatpush1.msra.mxu0 0.0
    %375 = vmatprep.subr.mxu0 0.0
    %376 = vmatpush1.msra.mxu0 0.0
    %377 = vmatprep.subr.mxu0 0.0
    %378 = vmatpush1.msra.mxu0 0.0
    %379 = vmatprep.subr.mxu0 0.0
    %380 = vmatpush1.msra.mxu0 0.0
    %381 = vmatprep.subr.mxu0 0.0
    %382 = vmatpush1.msra.mxu0 0.0
    %383 = vmatprep.subr.mxu0 0.0
    %384 = vmatpush1.msra.mxu0 0.0
    %385 = vmatprep.subr.mxu0 0.0
    %386 = vmatpush1.msra.mxu0 0.0
    %387 = vmatprep.subr.mxu0 0.0
    %388 = vmatpush1.msra.mxu0 0.0
    %389 = vmatprep.subr.mxu0 0.0
    %390 = vmatpush1.msra.mxu0 0.0
    %391 = vmatprep.subr.mxu0 0.0
    %392 = vmatpush1.msra.mxu0 0.0
    %393 = vmatprep.subr.mxu0 0.0
    %394 = vmatpush1.msra.mxu0 0.0
    %395 = vmatprep.subr.mxu0 0.0
    %396 = vmatpush1.msra.mxu0 0.0
    %397 = vmatprep.subr.mxu0 0.0
    %398 = vmatpush1.msra.mxu0 %v123
    %399 = vmatprep.subr.mxu0 0.0
    %400 = vmatpush1.msra.mxu0 %v122
    %401 = vmatprep.subr.mxu0 0.0
    %402 = vmatpush1.msra.mxu0 %v121
    %403 = vmatprep.subr.mxu0 0.0
    %404 = vmatpush1.msra.mxu0 %v120
    %405 = vmatprep.subr.mxu0 0.0
    %406 = vmatpush2.msra.mxu0 0.0
    %407 = vmatprep.subr.mxu0 0.0
    %408 = vmatpush2.msra.mxu0 0.0
    %409 = vmatprep.subr.mxu0 0.0
    %410 = vmatpush2.msra.mxu0 0.0
    %411 = vmatprep.subr.mxu0 0.0
    %412 = vmatpush2.msra.mxu0 0.0
    %413 = vmatprep.subr.mxu0 0.0
    %414 = vmatpush2.msra.mxu0 0.0
    %415 = vmatprep.subr.mxu0 0.0
    %416 = vmatpush2.msra.mxu0 0.0
    %417 = vmatprep.subr.mxu0 0.0
    %418 = vmatpush2.msra.mxu0 0.0
    %419 = vmatprep.subr.mxu0 0.0
    %420 = vmatpush2.msra.mxu0 0.0
    %421 = vmatprep.subr.mxu0 0.0
    %422 = vmatpush2.msra.mxu0 0.0
    %423 = vmatprep.subr.mxu0 0.0
    %424 = vmatpush2.msra.mxu0 0.0
    %425 = vmatprep.subr.mxu0 0.0
    %426 = vmatpush2.msra.mxu0 0.0
    %427 = vmatprep.subr.mxu0 0.0
    %428 = vmatpush2.msra.mxu0 0.0
    %429 = vmatprep.subr.mxu0 0.0
    %430 = vmatpush2.msra.mxu0 0.0
    %431 = vmatprep.subr.mxu0 0.0
    %432 = vmatpush2.msra.mxu0 0.0
    %433 = vmatprep.subr.mxu0 0.0
    %434 = vmatpush2.msra.mxu0 0.0
    %435 = vmatprep.subr.mxu0 0.0
    %436 = vmatpush2.msra.mxu0 0.0
    %437 = vmatprep.mubr.f32.mxu0 0.0
    %438 = vmatmul.mubr.f32.gmra.mxu0 %v371
    %v439 = vpop.f32.mrf.mxu0
    %v440 = vadd.f32 0.0, %v439
    %v441 = vpop.f32.mrf.mxu0
    %442 = vdwg.mxu0
    %444 = vrot.lane.b32.xlu0 %v440, 8
    %v445 = vpop.permute.xlu0 %444
    %v447 = vadd.f32 %v207, %v445
    %v448 = vmax.f32 %v447, 0.0
    %450 = vrot.lane.b32.xlu0 %v448, 120
    %v451 = vpop.permute.xlu0 %450
    %v452 = vsel %vm210, %v451, 0
    %454 = vmatprep.subr.mxu0 0.0
    %455 = vmatpush1.msra.mxu0 0.0
    %456 = vmatprep.subr.mxu0 0.0
    %457 = vmatpush1.msra.mxu0 0.0
    %458 = vmatprep.subr.mxu0 0.0
    %459 = vmatpush1.msra.mxu0 0.0
    %460 = vmatprep.subr.mxu0 0.0
    %461 = vmatpush1.msra.mxu0 0.0
    %462 = vmatprep.subr.mxu0 0.0
    %463 = vmatpush1.msra.mxu0 0.0
    %464 = vmatprep.subr.mxu0 0.0
    %465 = vmatpush1.msra.mxu0 0.0
    %466 = vmatprep.subr.mxu0 0.0
    %467 = vmatpush1.msra.mxu0 0.0
    %468 = vmatprep.subr.mxu0 0.0
    %469 = vmatpush1.msra.mxu0 0.0
    %470 = vmatprep.subr.mxu0 0.0
    %471 = vmatpush1.msra.mxu0 0.0
    %472 = vmatprep.subr.mxu0 0.0
    %473 = vmatpush1.msra.mxu0 0.0
    %474 = vmatprep.subr.mxu0 0.0
    %475 = vmatpush1.msra.mxu0 0.0
    %476 = vmatprep.subr.mxu0 0.0
    %477 = vmatpush1.msra.mxu0 0.0
    %478 = vmatprep.subr.mxu0 0.0
    %479 = vmatpush1.msra.mxu0 %v127
    %480 = vmatprep.subr.mxu0 0.0
    %481 = vmatpush1.msra.mxu0 %v126
    %482 = vmatprep.subr.mxu0 0.0
    %483 = vmatpush1.msra.mxu0 %v125
    %484 = vmatprep.subr.mxu0 0.0
    %485 = vmatpush1.msra.mxu0 %v124
    %486 = vmatprep.subr.mxu0 0.0
    %487 = vmatpush2.msra.mxu0 0.0
    %488 = vmatprep.subr.mxu0 0.0
    %489 = vmatpush2.msra.mxu0 0.0
    %490 = vmatprep.subr.mxu0 0.0
    %491 = vmatpush2.msra.mxu0 0.0
    %492 = vmatprep.subr.mxu0 0.0
    %493 = vmatpush2.msra.mxu0 0.0
    %494 = vmatprep.subr.mxu0 0.0
    %495 = vmatpush2.msra.mxu0 0.0
    %496 = vmatprep.subr.mxu0 0.0
    %497 = vmatpush2.msra.mxu0 0.0
    %498 = vmatprep.subr.mxu0 0.0
    %499 = vmatpush2.msra.mxu0 0.0
    %500 = vmatprep.subr.mxu0 0.0
    %501 = vmatpush2.msra.mxu0 0.0
    %502 = vmatprep.subr.mxu0 0.0
    %503 = vmatpush2.msra.mxu0 0.0
    %504 = vmatprep.subr.mxu0 0.0
    %505 = vmatpush2.msra.mxu0 0.0
    %506 = vmatprep.subr.mxu0 0.0
    %507 = vmatpush2.msra.mxu0 0.0
    %508 = vmatprep.subr.mxu0 0.0
    %509 = vmatpush2.msra.mxu0 0.0
    %510 = vmatprep.subr.mxu0 0.0
    %511 = vmatpush2.msra.mxu0 0.0
    %512 = vmatprep.subr.mxu0 0.0
    %513 = vmatpush2.msra.mxu0 0.0
    %514 = vmatprep.subr.mxu0 0.0
    %515 = vmatpush2.msra.mxu0 0.0
    %516 = vmatprep.subr.mxu0 0.0
    %517 = vmatpush2.msra.mxu0 0.0
    %518 = vmatprep.mubr.f32.mxu0 0.0
    %519 = vmatmul.mubr.f32.gmra.mxu0 %v452
    %v520 = vpop.f32.mrf.mxu0
    %v521 = vadd.f32 %v134, %v520
    %v522 = vpop.f32.mrf.mxu0
    %523 = vdwg.mxu0
    %525 = vrot.lane.b32.xlu0 %v281, 120
    %v526 = vpop.permute.xlu0 %525
    %v528 = vadd.f32 %v521, %v526
    %v529 = vxor.u32 %v528, 2147483648
    %v530 = vmul.f32 %v529, 1.442695
    %v531 = vpow.pop %v530
    %v532 = vadd.f32 %v531, 1.0
    %v533 = vrcp.pop %v532
    %v534 = vmul.f32 1.0, %v533
    %535 = vrot.lane.b32.xlu0 %v281, 56
    %v536 = vpop.permute.xlu0 %535
    %v538 = vmul.f32 %v534, %v536
    %540 = vrot.lane.b32.xlu0 %v538, 64
    %v541 = vpop.permute.xlu0 %540
    %v543 = vadd.f32 %v521, %v541
    %v544 = vtanh.pop %v543
    %v545 = vsub.f32 1.0, %v534
    %547 = vrot.lane.b32.xlu0 %v544, 96
    %v548 = vpop.permute.xlu0 %547
    %v550 = vmul.f32 %v545, %v548
    %551 = vrot.lane.b32.xlu0 %v112, 32
    %v552 = vpop.permute.xlu0 %551
    %v554 = vmul.f32 %v534, %v552
    %v555 = vadd.f32 %v550, %v554
    %557 = vrot.lane.b32.xlu0 %v555, 96
    %v558 = vpop.permute.xlu0 %557
    %v559 = vsel %vm210, %v558, 0
    %561 = vmatprep.subr.mxu0 0.0
    %562 = vmatpush1.msra.mxu0 0.0
    %563 = vmatprep.subr.mxu0 0.0
    %564 = vmatpush1.msra.mxu0 0.0
    %565 = vmatprep.subr.mxu0 0.0
    %566 = vmatpush1.msra.mxu0 0.0
    %567 = vmatprep.subr.mxu0 0.0
    %568 = vmatpush1.msra.mxu0 0.0
    %569 = vmatprep.subr.mxu0 0.0
    %570 = vmatpush1.msra.mxu0 0.0
    %571 = vmatprep.subr.mxu0 0.0
    %572 = vmatpush1.msra.mxu0 0.0
    %573 = vmatprep.subr.mxu0 0.0
    %574 = vmatpush1.msra.mxu0 0.0
    %575 = vmatprep.subr.mxu0 0.0
    %576 = vmatpush1.msra.mxu0 0.0
    %577 = vmatprep.subr.mxu0 0.0
    %578 = vmatpush1.msra.mxu0 0.0
    %579 = vmatprep.subr.mxu0 0.0
    %580 = vmatpush1.msra.mxu0 0.0
    %581 = vmatprep.subr.mxu0 0.0
    %582 = vmatpush1.msra.mxu0 0.0
    %583 = vmatprep.subr.mxu0 0.0
    %584 = vmatpush1.msra.mxu0 0.0
    %585 = vmatprep.subr.mxu0 0.0
    %586 = vmatpush1.msra.mxu0 %v131
    %587 = vmatprep.subr.mxu0 0.0
    %588 = vmatpush1.msra.mxu0 %v130
    %589 = vmatprep.subr.mxu0 0.0
    %590 = vmatpush1.msra.mxu0 %v129
    %591 = vmatprep.subr.mxu0 0.0
    %592 = vmatpush1.msra.mxu0 %v128
    %593 = vmatprep.subr.mxu0 0.0
    %594 = vmatpush2.msra.mxu0 0.0
    %595 = vmatprep.subr.mxu0 0.0
    %596 = vmatpush2.msra.mxu0 0.0
    %597 = vmatprep.subr.mxu0 0.0
    %598 = vmatpush2.msra.mxu0 0.0
    %599 = vmatprep.subr.mxu0 0.0
    %600 = vmatpush2.msra.mxu0 0.0
    %601 = vmatprep.subr.mxu0 0.0
    %602 = vmatpush2.msra.mxu0 0.0
    %603 = vmatprep.subr.mxu0 0.0
    %604 = vmatpush2.msra.mxu0 0.0
    %605 = vmatprep.subr.mxu0 0.0
    %606 = vmatpush2.msra.mxu0 0.0
    %607 = vmatprep.subr.mxu0 0.0
    %608 = vmatpush2.msra.mxu0 0.0
    %609 = vmatprep.subr.mxu0 0.0
    %610 = vmatpush2.msra.mxu0 0.0
    %611 = vmatprep.subr.mxu0 0.0
    %612 = vmatpush2.msra.mxu0 0.0
    %613 = vmatprep.subr.mxu0 0.0
    %614 = vmatpush2.msra.mxu0 0.0
    %615 = vmatprep.subr.mxu0 0.0
    %616 = vmatpush2.msra.mxu0 0.0
    %617 = vmatprep.subr.mxu0 0.0
    %618 = vmatpush2.msra.mxu0 0.0
    %619 = vmatprep.subr.mxu0 0.0
    %620 = vmatpush2.msra.mxu0 0.0
    %621 = vmatprep.subr.mxu0 0.0
    %622 = vmatpush2.msra.mxu0 0.0
    %623 = vmatprep.subr.mxu0 0.0
    %624 = vmatpush2.msra.mxu0 0.0
    %625 = vmatprep.mubr.f32.mxu0 0.0
    %626 = vmatmul.mubr.f32.gmra.mxu0 %v559
    %v627 = vpop.f32.mrf.mxu0
    %v628 = vadd.f32 %v135, %v627
    %v629 = vpop.f32.mrf.mxu0
    %630 = vdwg.mxu0
    %631 = vst.msk [vmem:[#allocation13] sm:$0xff] %vm136, %v628
    %633 = vst.msk [vmem:[#allocation14] sm:$0xff] %vm210, %v558
    %634 = vst.msk [vmem:[#allocation16] sm:$0xff] %vm285, %v296
    // Predicated region
    $region62: #{tpu_custom_call.1} parent=1 // pred_check
      _
    $region63: #{tpu_custom_call.1} parent=1 // pred_check_branch
      %636 = sbr.rel (0) target = $region65
    $region64: #{tpu_custom_call.1} parent=1 // pred_region
      %s638 = ssub.s32 128, 128
      %639 = vsyncadd [#allocation4], %s638
      %s641 = sshll.u32 [#allocation13], 4
      %s642 = int_to_ptr.vmem [resolvable:$true] %s641
      %644 = dma.vmem_to_hbm [thread:$0]  %s642, 128, %s9, [#allocation4]
    $region65: #{tpu_custom_call.1} parent=1 // pred_fallthru
      _
    // Predicated region
    $region66: #{tpu_custom_call.1} parent=1 // pred_check
      _
    $region67: #{tpu_custom_call.1} parent=1 // pred_check_branch
      %646 = sbr.rel (0) target = $region69
    $region68: #{tpu_custom_call.1} parent=1 // pred_region
      %s648 = ssub.s32 128, 128
      %649 = vsyncadd [#allocation15], %s648
      %s651 = sshll.u32 [#allocation14], 4
      %s652 = int_to_ptr.vmem [resolvable:$true] %s651
      %654 = dma.vmem_to_hbm [thread:$0]  %s652, 128, %s10, [#allocation15]
    $region69: #{tpu_custom_call.1} parent=1 // pred_fallthru
      _
    // Predicated region
    $region70: #{tpu_custom_call.1} parent=1 // pred_check
      _
    $region71: #{tpu_custom_call.1} parent=1 // pred_check_branch
      %656 = sbr.rel (0) target = $region73
    $region72: #{tpu_custom_call.1} parent=1 // pred_region
      %s658 = ssub.s32 128, 128
      %659 = vsyncadd [#allocation15], %s658
      %s661 = sshll.u32 [#allocation16], 4
      %s662 = int_to_ptr.vmem [resolvable:$true] %s661
      %664 = dma.vmem_to_hbm [thread:$0]  %s662, 128, %s11, [#allocation15]
    $region73: #{tpu_custom_call.1} parent=1 // pred_fallthru
      _
    // Predicated region
    $region74: #{tpu_custom_call.1} parent=1 // pred_check
      _
    $region75: #{tpu_custom_call.1} parent=1 // pred_check_branch
      %666 = sbr.rel (0) target = $region77
    $region76: #{tpu_custom_call.1} parent=1 // pred_region
      %667 = dma.done [#allocation4], 128
    $region77: #{tpu_custom_call.1} parent=1 // pred_fallthru
      _
    // Predicated region
    $region78: #{tpu_custom_call.1} parent=1 // pred_check
      _
    $region79: #{tpu_custom_call.1} parent=1 // pred_check_branch
      %669 = sbr.rel (0) target = $region81
    $region80: #{tpu_custom_call.1} parent=1 // pred_region
      %670 = dma.done [#allocation15], 128
    $region81: #{tpu_custom_call.1} parent=1 // pred_fallthru
      _
    // Predicated region
    $region82: #{tpu_custom_call.1} parent=1 // pred_check
      _
    $region83: #{tpu_custom_call.1} parent=1 // pred_check_branch
      %672 = sbr.rel (0) target = $region85
    $region84: #{tpu_custom_call.1} parent=1 // pred_region
      %673 = dma.done [#allocation15], 128
    $region85: #{tpu_custom_call.1} parent=1 // pred_fallthru
      _
    %674 = vsyncpa [#allocation3], 1
    %675 = vsyncpa [#allocation6], 1
    %676 = vsyncpa [#allocation9], 1
    %677 = vsyncpa [#allocation12], 1
    %678 = vsyncpa [#allocation4], 1
    %679 = vsyncpa [#allocation15], 1

</llo_original>
